<compile_context>
chip_gen: v7x
topology: tpu7x:2x2x1
jax: 0.10.0
libtpu: 0.0.40
codegen_flags: <defaults>
</compile_context>

<pallas_src>
import jax
import jax.numpy as jnp
from jax.experimental import pallas as pl
from jax.experimental.pallas import tpu as pltpu

HIDDEN1 = 512
HIDDEN2 = 256

# Max batch rows per tile. At (TB, 512) f32 intermediates this comfortably
# fits the default scoped VMEM on every generation (v5e 16 MiB, v6e/v7x 32 MiB).
TB_MAX = 512


def _mlp_kernel(x_ref, w1_ref, b1_ref, w2_ref, b2_ref, w3_ref, b3_ref, out_ref):
    # Layer 1: Linear (bf16 inputs, f32 accumulate) + bias + ReLU
    x = x_ref[...].astype(jnp.bfloat16)
    h1 = jnp.dot(x, w1_ref[...], preferred_element_type=jnp.float32) + b1_ref[...]
    h1 = jnp.maximum(h1, 0.0)

    # Layer 2: Linear + bias + ReLU
    h2 = jnp.dot(h1.astype(jnp.bfloat16), w2_ref[...],
                 preferred_element_type=jnp.float32) + b2_ref[...]
    h2 = jnp.maximum(h2, 0.0)

    # Layer 3: Linear + bias (no activation)
    out = jnp.dot(h2.astype(jnp.bfloat16), w3_ref[...],
                  preferred_element_type=jnp.float32) + b3_ref[...]
    out_ref[...] = out.astype(out_ref.dtype)


def net_forward(state, params, *, tb_max=TB_MAX):
    """Run the 3-layer MLP forward pass in one fused Pallas kernel.

    state:  [B, state_dimen] float32
    params: dict with
        w1 [state_dimen, H1] bf16, b1 [1, H1] f32,
        w2 [H1, H2]          bf16, b2 [1, H2] f32,
        w3 [H2, action_dimen] bf16, b3 [1, action_dimen] f32
      (weights already transposed from PyTorch's [out, in] convention)
    """
    B, state_dimen = state.shape
    action_dimen = params["w3"].shape[1]

    # Pad batch to a sublane multiple (8) and pick a batch tile.
    padded_b = max(8, ((B + 7) // 8) * 8)
    if padded_b <= tb_max:
        tb = padded_b
    else:
        tb = tb_max
        padded_b = ((B + tb - 1) // tb) * tb
    if padded_b != B:
        state = jnp.pad(state, ((0, padded_b - B), (0, 0)))

    grid = (padded_b // tb,)

    w1, b1 = params["w1"], params["b1"]
    w2, b2 = params["w2"], params["b2"]
    w3, b3 = params["w3"], params["b3"]

    in_specs = [
        # x: tiled over batch (double-buffered by the pipeline)
        pl.BlockSpec((tb, state_dimen), lambda i: (i, 0)),
        # weights & biases: constant index_map -> VMEM-resident, DMA'd once
        pl.BlockSpec((state_dimen, HIDDEN1), lambda i: (0, 0)),
        pl.BlockSpec((1, HIDDEN1), lambda i: (0, 0)),
        pl.BlockSpec((HIDDEN1, HIDDEN2), lambda i: (0, 0)),
        pl.BlockSpec((1, HIDDEN2), lambda i: (0, 0)),
        pl.BlockSpec((HIDDEN2, action_dimen), lambda i: (0, 0)),
        pl.BlockSpec((1, action_dimen), lambda i: (0, 0)),
    ]
    out_spec = pl.BlockSpec((tb, action_dimen), lambda i: (i, 0))

    flops = 2 * padded_b * (state_dimen * HIDDEN1
                            + HIDDEN1 * HIDDEN2
                            + HIDDEN2 * action_dimen)
    bytes_accessed = (
        state.size * state.dtype.itemsize
        + sum(a.size * a.dtype.itemsize for a in (w1, b1, w2, b2, w3, b3))
        + padded_b * action_dimen * 4
    )

    out = pl.pallas_call(
        _mlp_kernel,
        grid=grid,
        in_specs=in_specs,
        out_specs=out_spec,
        out_shape=jax.ShapeDtypeStruct((padded_b, action_dimen), jnp.float32),
        compiler_params=pltpu.CompilerParams(
            dimension_semantics=("parallel",),
            vmem_limit_bytes=32 * 1024 * 1024,
        ),
        cost_estimate=pl.CostEstimate(
            flops=flops, transcendentals=0, bytes_accessed=bytes_accessed),
    )(state, w1, b1, w2, b2, w3, b3)

    return out[:B]


def init_params(key, state_dimen, action_dimen):
    """Deterministic parameter init matching nn.Linear shapes (transposed).

    Weights are stored in bfloat16 (kernel matmul dtype); biases stay float32.
    """
    k1, k2, k3, k4, k5, k6 = jax.random.split(key, 6)

    def uniform_linear(kw, kb, fan_in, fan_out):
        # PyTorch default: U(-1/sqrt(fan_in), 1/sqrt(fan_in))
        bound = 1.0 / jnp.sqrt(jnp.float32(fan_in))
        w = jax.random.uniform(kw, (fan_in, fan_out), jnp.float32, -bound, bound)
        b = jax.random.uniform(kb, (1, fan_out), jnp.float32, -bound, bound)
        return w.astype(jnp.bfloat16), b

    w1, b1 = uniform_linear(k1, k2, state_dimen, HIDDEN1)
    w2, b2 = uniform_linear(k3, k4, HIDDEN1, HIDDEN2)
    w3, b3 = uniform_linear(k5, k6, HIDDEN2, action_dimen)
    return {"w1": w1, "b1": b1, "w2": w2, "b2": b2, "w3": w3, "b3": b3}


def net_forward_ref(state, params):
    """Pure-JAX reference of the PyTorch forward pass (same bf16/f32 recipe)."""
    def dense(x, w, b):
        return jnp.dot(x.astype(jnp.bfloat16), w,
                       preferred_element_type=jnp.float32) + b

    h1 = jnp.maximum(dense(state, params["w1"], params["b1"]), 0.0)
    h2 = jnp.maximum(dense(h1, params["w2"], params["b2"]), 0.0)
    return dense(h2, params["w3"], params["b3"])


if __name__ == "__main__":
    key = jax.random.PRNGKey(0)
    k_params, k_state = jax.random.split(key)

    batch = 2
    state_dimen = 16
    action_dimen = 4

    params = init_params(k_params, state_dimen, action_dimen)
    state = jax.random.normal(k_state, (batch, state_dimen), jnp.float32)

    out = net_forward(state, params)
    out = jax.block_until_ready(out)

    ref = net_forward_ref(state, params)
    assert out.shape == (batch, action_dimen)
    assert jnp.allclose(out, ref, atol=1e-3, rtol=1e-3), "mismatch vs reference"

    print("KERNEL_OK")
</pallas_src>

<mosaic_0001>
module attributes {stable_mosaic.version = 11 : i64} {
  func.func @_mlp_kernel(%arg0: i32, %arg1: memref<8x16xf32, #tpu.memory_space<vmem>>, %arg2: memref<16x512xbf16, #tpu.memory_space<vmem>>, %arg3: memref<1x512xf32, #tpu.memory_space<vmem>>, %arg4: memref<512x256xbf16, #tpu.memory_space<vmem>>, %arg5: memref<1x256xf32, #tpu.memory_space<vmem>>, %arg6: memref<256x4xbf16, #tpu.memory_space<vmem>>, %arg7: memref<1x4xf32, #tpu.memory_space<vmem>>, %arg8: memref<8x4xf32, #tpu.memory_space<vmem>>) attributes {dimension_semantics = [#tpu.dimension_semantics<parallel>], iteration_bounds = array<i64: 1>, scalar_prefetch = 0 : i64, scratch_operands = 0 : i64, tpu.core_type = #tpu.core_type<tc>, window_params = [{transform_indices = @transform_0, window_bounds = array<i64: 8, 16>}, {pipeline_mode = #tpu.pipeline_mode<synchronous>, transform_indices = @transform_1, window_bounds = array<i64: 16, 512>}, {pipeline_mode = #tpu.pipeline_mode<synchronous>, transform_indices = @transform_2, window_bounds = array<i64: 1, 512>}, {pipeline_mode = #tpu.pipeline_mode<synchronous>, transform_indices = @transform_3, window_bounds = array<i64: 512, 256>}, {pipeline_mode = #tpu.pipeline_mode<synchronous>, transform_indices = @transform_4, window_bounds = array<i64: 1, 256>}, {pipeline_mode = #tpu.pipeline_mode<synchronous>, transform_indices = @transform_5, window_bounds = array<i64: 256, 4>}, {pipeline_mode = #tpu.pipeline_mode<synchronous>, transform_indices = @transform_6, window_bounds = array<i64: 1, 4>}, {transform_indices = @transform_7, window_bounds = array<i64: 8, 4>}]} {
    %c0 = arith.constant 0 : index
    %c0_0 = arith.constant 0 : index
    %0 = vector.load %arg1[%c0, %c0_0] : memref<8x16xf32, #tpu.memory_space<vmem>>, vector<8x16xf32>
    %1 = arith.truncf %0 : vector<8x16xf32> to vector<8x16xbf16>
    %c0_1 = arith.constant 0 : index
    %c0_2 = arith.constant 0 : index
    %2 = vector.load %arg2[%c0_1, %c0_2] : memref<16x512xbf16, #tpu.memory_space<vmem>>, vector<16x512xbf16>
    %cst = arith.constant dense<0.000000e+00> : vector<8x512xf32>
    %3 = tpu.matmul %1, %2, %cst {dimension_numbers = #tpu.dot_dimension_numbers<[1], [0], [0], [1], [0, 0, 1, 1], [], []>} : vector<8x16xbf16>, vector<16x512xbf16>, vector<8x512xf32> -> vector<8x512xf32>
    %c0_3 = arith.constant 0 : index
    %c0_4 = arith.constant 0 : index
    %4 = vector.load %arg3[%c0_3, %c0_4] : memref<1x512xf32, #tpu.memory_space<vmem>>, vector<1x512xf32>
    %5 = vector.broadcast %4 : vector<1x512xf32> to vector<8x512xf32>
    %6 = arith.addf %3, %5 : vector<8x512xf32>
    %cst_5 = arith.constant 0.000000e+00 : f32
    %7 = vector.broadcast %cst_5 : f32 to vector<8x512xf32>
    %8 = arith.maximumf %6, %7 : vector<8x512xf32>
    %9 = arith.truncf %8 : vector<8x512xf32> to vector<8x512xbf16>
    %c0_6 = arith.constant 0 : index
    %c0_7 = arith.constant 0 : index
    %10 = vector.load %arg4[%c0_6, %c0_7] : memref<512x256xbf16, #tpu.memory_space<vmem>>, vector<512x256xbf16>
    %cst_8 = arith.constant dense<0.000000e+00> : vector<8x256xf32>
    %11 = tpu.matmul %9, %10, %cst_8 {dimension_numbers = #tpu.dot_dimension_numbers<[1], [0], [0], [1], [0, 0, 1, 1], [], []>} : vector<8x512xbf16>, vector<512x256xbf16>, vector<8x256xf32> -> vector<8x256xf32>
    %c0_9 = arith.constant 0 : index
    %c0_10 = arith.constant 0 : index
    %12 = vector.load %arg5[%c0_9, %c0_10] : memref<1x256xf32, #tpu.memory_space<vmem>>, vector<1x256xf32>
    %13 = vector.broadcast %12 : vector<1x256xf32> to vector<8x256xf32>
    %14 = arith.addf %11, %13 : vector<8x256xf32>
    %cst_11 = arith.constant 0.000000e+00 : f32
    %15 = vector.broadcast %cst_11 : f32 to vector<8x256xf32>
    %16 = arith.maximumf %14, %15 : vector<8x256xf32>
    %17 = arith.truncf %16 : vector<8x256xf32> to vector<8x256xbf16>
    %c0_12 = arith.constant 0 : index
    %c0_13 = arith.constant 0 : index
    %18 = vector.load %arg6[%c0_12, %c0_13] : memref<256x4xbf16, #tpu.memory_space<vmem>>, vector<256x4xbf16>
    %cst_14 = arith.constant dense<0.000000e+00> : vector<8x4xf32>
    %19 = tpu.matmul %17, %18, %cst_14 {dimension_numbers = #tpu.dot_dimension_numbers<[1], [0], [0], [1], [0, 0, 1, 1], [], []>} : vector<8x256xbf16>, vector<256x4xbf16>, vector<8x4xf32> -> vector<8x4xf32>
    %c0_15 = arith.constant 0 : index
    %c0_16 = arith.constant 0 : index
    %20 = vector.load %arg7[%c0_15, %c0_16] : memref<1x4xf32, #tpu.memory_space<vmem>>, vector<1x4xf32>
    %21 = vector.broadcast %20 : vector<1x4xf32> to vector<8x4xf32>
    %22 = arith.addf %19, %21 : vector<8x4xf32>
    %c0_17 = arith.constant 0 : index
    %c0_18 = arith.constant 0 : index
    %23 = vector.load %arg8[%c0_17, %c0_18] : memref<8x4xf32, #tpu.memory_space<vmem>>, vector<8x4xf32>
    tpu.vector_store %arg8[%c0_17, %c0_18], %22 {strides = array<i32>} : memref<8x4xf32, #tpu.memory_space<vmem>>, vector<8x4xf32>,
    return
  }
  func.func @transform_0(%arg0: i32) -> (i32, i32) {
    %c0_i32 = arith.constant 0 : i32
    %c0_i32_0 = arith.constant 0 : i32
    return %arg0, %c0_i32 : i32, i32
  }
  func.func @transform_1(%arg0: i32) -> (i32, i32) {
    %c0_i32 = arith.constant 0 : i32
    %c0_i32_0 = arith.constant 0 : i32
    %c0_i32_1 = arith.constant 0 : i32
    return %c0_i32, %c0_i32_0 : i32, i32
  }
  func.func @transform_2(%arg0: i32) -> (i32, i32) {
    %c0_i32 = arith.constant 0 : i32
    %c0_i32_0 = arith.constant 0 : i32
    %c0_i32_1 = arith.constant 0 : i32
    return %c0_i32, %c0_i32_0 : i32, i32
  }
  func.func @transform_3(%arg0: i32) -> (i32, i32) {
    %c0_i32 = arith.constant 0 : i32
    %c0_i32_0 = arith.constant 0 : i32
    %c0_i32_1 = arith.constant 0 : i32
    return %c0_i32, %c0_i32_0 : i32, i32
  }
  func.func @transform_4(%arg0: i32) -> (i32, i32) {
    %c0_i32 = arith.constant 0 : i32
    %c0_i32_0 = arith.constant 0 : i32
    %c0_i32_1 = arith.constant 0 : i32
    return %c0_i32, %c0_i32_0 : i32, i32
  }
  func.func @transform_5(%arg0: i32) -> (i32, i32) {
    %c0_i32 = arith.constant 0 : i32
    %c0_i32_0 = arith.constant 0 : i32
    %c0_i32_1 = arith.constant 0 : i32
    return %c0_i32, %c0_i32_0 : i32, i32
  }
  func.func @transform_6(%arg0: i32) -> (i32, i32) {
    %c0_i32 = arith.constant 0 : i32
    %c0_i32_0 = arith.constant 0 : i32
    %c0_i32_1 = arith.constant 0 : i32
    return %c0_i32, %c0_i32_0 : i32, i32
  }
  func.func @transform_7(%arg0: i32) -> (i32, i32) {
    %c0_i32 = arith.constant 0 : i32
    %c0_i32_0 = arith.constant 0 : i32
    return %arg0, %c0_i32 : i32, i32
  }
}

</mosaic_0001>

<llo_original>
// kernel: tpu_custom_call.1
$region0: #{tpu_custom_call.1}
  #allocation0 [shape = 'u32[]', space=smem, size = 0x4, offset = 0x4, fixed_abs, tag = 'smem constant byte address 0x4 - core index']
  #allocation1 [shape = 'u32[144,128]{1,0:T(1,128)}', space=vmem, size = 0x12000, scoped, tag = 'internal scratch']
  %s0 = inlined_call_operand.vmem [shape: f32[8,16], index: 0, kind: input, shape index: {}]
  %s1 = inlined_call_operand.vmem [shape: bf16[16,512], index: 1, kind: input, shape index: {}]
  %s2 = inlined_call_operand.vmem [shape: f32[1,512], index: 2, kind: input, shape index: {}]
  %s3 = inlined_call_operand.hbm [shape: bf16[512,256], index: 3, kind: input, shape index: {}]
  %s4 = inlined_call_operand.vmem [shape: f32[1,256], index: 4, kind: input, shape index: {}]
  %s5 = inlined_call_operand.vmem [shape: bf16[256,4], index: 5, kind: input, shape index: {}]
  %s6 = inlined_call_operand.vmem [shape: f32[1,4], index: 6, kind: input, shape index: {}]
  %s7 = inlined_call_operand.vmem [shape: f32[8,4], index: 7, kind: output, shape index: {}]
  %s8 = sld [smem:[#allocation0]]
  $region42: #{tpu_custom_call.1} parent=0
    _
  %s10 = ssub.s32 1, %s8
  %s11 = scalar_select 0, %s10, %s8
  $region1: #{tpu_custom_call.1} parent=0
    #allocation2 [shape = 'u8[262144]{0}', space=vmem, size = 0x40000, scoped, tag = 'input window, operand 3, single buffered']
    #allocation3 [shape = 's32[1]{0}', space=sflag, size = 0x4, scoped, tag = 'scoped memory for tpu_custom_call.1']
    %12 = vsyncpa [#allocation3], 0
    // Predicated region
    $region2: #{tpu_custom_call.1} parent=1 // pred_check
      _
    $region3: #{tpu_custom_call.1} parent=1 // pred_check_branch
      %14 = sbr.rel (0) target = $region5
    $region4: #{tpu_custom_call.1} parent=1 // pred_region
      _
    $region5: #{tpu_custom_call.1} parent=1 // pred_fallthru
      _
    // Predicated region
    $region6: #{tpu_custom_call.1} parent=1 // pred_check
      _
    $region7: #{tpu_custom_call.1} parent=1 // pred_check_branch
      %16 = sbr.rel (0) target = $region9
    $region8: #{tpu_custom_call.1} parent=1 // pred_region
      _
    $region9: #{tpu_custom_call.1} parent=1 // pred_fallthru
      _
    // Predicated region
    $region10: #{tpu_custom_call.1} parent=1 // pred_check
      _
    $region11: #{tpu_custom_call.1} parent=1 // pred_check_branch
      %18 = sbr.rel (0) target = $region13
    $region12: #{tpu_custom_call.1} parent=1 // pred_region
      _
    $region13: #{tpu_custom_call.1} parent=1 // pred_fallthru
      _
    // Predicated region
    $region14: #{tpu_custom_call.1} parent=1 // pred_check
      _
    $region15: #{tpu_custom_call.1} parent=1 // pred_check_branch
      %20 = sbr.rel (0) target = $region17
    $region16: #{tpu_custom_call.1} parent=1 // pred_region
      %s22 = ssub.s32 8192, 8192
      %23 = vsyncadd [#allocation3], %s22
      %s24 = sshll.u32 [#allocation2], 4
      %s25 = int_to_ptr.vmem [resolvable:$true] %s24
      %30 = dma.hbm_to_vmem [thread:$0]  %s3, 8192, %s25, [#allocation3], 128, 128, 8
    $region17: #{tpu_custom_call.1} parent=1 // pred_fallthru
      _
    // Predicated region
    $region18: #{tpu_custom_call.1} parent=1 // pred_check
      _
    $region19: #{tpu_custom_call.1} parent=1 // pred_check_branch
      %32 = sbr.rel (0) target = $region21
    $region20: #{tpu_custom_call.1} parent=1 // pred_region
      _
    $region21: #{tpu_custom_call.1} parent=1 // pred_fallthru
      _
    // Predicated region
    $region22: #{tpu_custom_call.1} parent=1 // pred_check
      _
    $region23: #{tpu_custom_call.1} parent=1 // pred_check_branch
      %34 = sbr.rel (0) target = $region25
    $region24: #{tpu_custom_call.1} parent=1 // pred_region
      _
    $region25: #{tpu_custom_call.1} parent=1 // pred_fallthru
      _
    // Predicated region
    $region26: #{tpu_custom_call.1} parent=1 // pred_check
      _
    $region27: #{tpu_custom_call.1} parent=1 // pred_check_branch
      %36 = sbr.rel (0) target = $region29
    $region28: #{tpu_custom_call.1} parent=1 // pred_region
      _
    $region29: #{tpu_custom_call.1} parent=1 // pred_fallthru
      _
    // Predicated region
    $region30: #{tpu_custom_call.1} parent=1 // pred_check
      _
    $region31: #{tpu_custom_call.1} parent=1 // pred_check_branch
      %38 = sbr.rel (0) target = $region33
    $region32: #{tpu_custom_call.1} parent=1 // pred_region
      %39 = dma.done [#allocation3], 8192
    $region33: #{tpu_custom_call.1} parent=1 // pred_fallthru
      _
    %v41 = vld [vmem:[%s0] sm:$0xff]
    %v42 = vpack.c.bf16 %v41, %v41
    %v43 = vld [vmem:[%s1] sm:$0xff]
    %v44 = vld [vmem:[%s1 + $0x8] sm:$0xff]
    %v45 = vld [vmem:[%s1 + $0x10] sm:$0xff]
    %v46 = vld [vmem:[%s1 + $0x18] sm:$0xff]
    %v47 = vld [vmem:[%s2] sm:$0xf]
    %v49 = vlaneseq
    %v50 = vshrl.u32 %v49, 7
    %v51 = vsub.s32 0, %v50
    %v52 = vrot.slane %v47, %v51
    %v53 = vlaneseq
    %v54 = vshrl.u32 %v53, 7
    %v55 = vsub.s32 1, %v54
    %v56 = vrot.slane %v47, %v55
    %v57 = vlaneseq
    %v58 = vshrl.u32 %v57, 7
    %v59 = vsub.s32 2, %v58
    %v60 = vrot.slane %v47, %v59
    %v61 = vlaneseq
    %v62 = vshrl.u32 %v61, 7
    %v63 = vsub.s32 3, %v62
    %v64 = vrot.slane %v47, %v63
    %v73 = vunpack.c.l.b16 %v43
    %v74 = vunpack.c.h.b16 %v43
    %v75 = vunpack.c.l.b16 %v44
    %v76 = vunpack.c.h.b16 %v44
    %v77 = vunpack.c.l.b16 %v45
    %v78 = vunpack.c.h.b16 %v45
    %v79 = vunpack.c.l.b16 %v46
    %v80 = vunpack.c.h.b16 %v46
    %v81 = vpack.c.b16 %v77, %v73
    %v82 = vpack.c.b16 %v78, %v74
    %v83 = vpack.c.b16 %v79, %v75
    %v84 = vpack.c.b16 %v80, %v76
    %vm89 = vcmask 130048
    %v91 = vsel %vm89, %v42, 0
    %93 = vmatprep.subr.bf16.mxu0 %v82
    %94 = vmatpush1.bf16.msra.mxu0 %v81
    %95 = vmatprep.subr.bf16.mxu0 0
    %96 = vmatpush1.bf16.msra.mxu0 0
    %97 = vmatprep.subr.bf16.mxu0 0
    %98 = vmatpush1.bf16.msra.mxu0 0
    %99 = vmatprep.subr.bf16.mxu0 0
    %100 = vmatpush1.bf16.msra.mxu0 0
    %101 = vmatprep.subr.bf16.mxu0 0
    %102 = vmatpush1.bf16.msra.mxu0 0
    %103 = vmatprep.subr.bf16.mxu0 0
    %104 = vmatpush1.bf16.msra.mxu0 0
    %105 = vmatprep.subr.bf16.mxu0 0
    %106 = vmatpush1.bf16.msra.mxu0 0
    %107 = vmatprep.subr.bf16.mxu0 0
    %108 = vmatpush1.bf16.msra.mxu0 0
    %109 = vmatprep.subr.bf16.mxu0 0
    %110 = vmatpush1.bf16.msra.mxu0 0
    %111 = vmatprep.subr.bf16.mxu0 0
    %112 = vmatpush1.bf16.msra.mxu0 0
    %113 = vmatprep.subr.bf16.mxu0 0
    %114 = vmatpush1.bf16.msra.mxu0 0
    %115 = vmatprep.subr.bf16.mxu0 0
    %116 = vmatpush1.bf16.msra.mxu0 0
    %117 = vmatprep.subr.bf16.mxu0 0
    %118 = vmatpush1.bf16.msra.mxu0 0
    %119 = vmatprep.subr.bf16.mxu0 0
    %120 = vmatpush1.bf16.msra.mxu0 0
    %121 = vmatprep.subr.bf16.mxu0 0
    %122 = vmatpush1.bf16.msra.mxu0 0
    %123 = vmatprep.subr.bf16.mxu0 0
    %124 = vmatpush1.bf16.msra.mxu0 0
    %125 = vmatprep.mubr.bf16.mxu0 0
    %126 = vmatmul.mubr.bf16.gmra.mrb[0].mxu0 %v91
    %v127 = vpop.f32.mrb[0].mxu0
    %v128 = vadd.f32 %v52, %v127
    %v129 = vpop.f32.mrb[0].mxu0
    %v130 = vadd.f32 %v56, %v129
    %v131 = vpop.f32.mrb[0].mxu0
    %v132 = vpop.f32.mrb[0].mxu0
    %133 = vdwg.mxu0
    %134 = vmatprep.subr.bf16.mxu0 %v84
    %135 = vmatpush1.bf16.msra.mxu0 %v83
    %136 = vmatprep.subr.bf16.mxu0 0
    %137 = vmatpush1.bf16.msra.mxu0 0
    %138 = vmatprep.subr.bf16.mxu0 0
    %139 = vmatpush1.bf16.msra.mxu0 0
    %140 = vmatprep.subr.bf16.mxu0 0
    %141 = vmatpush1.bf16.msra.mxu0 0
    %142 = vmatprep.subr.bf16.mxu0 0
    %143 = vmatpush1.bf16.msra.mxu0 0
    %144 = vmatprep.subr.bf16.mxu0 0
    %145 = vmatpush1.bf16.msra.mxu0 0
    %146 = vmatprep.subr.bf16.mxu0 0
    %147 = vmatpush1.bf16.msra.mxu0 0
    %148 = vmatprep.subr.bf16.mxu0 0
    %149 = vmatpush1.bf16.msra.mxu0 0
    %150 = vmatprep.subr.bf16.mxu0 0
    %151 = vmatpush1.bf16.msra.mxu0 0
    %152 = vmatprep.subr.bf16.mxu0 0
    %153 = vmatpush1.bf16.msra.mxu0 0
    %154 = vmatprep.subr.bf16.mxu0 0
    %155 = vmatpush1.bf16.msra.mxu0 0
    %156 = vmatprep.subr.bf16.mxu0 0
    %157 = vmatpush1.bf16.msra.mxu0 0
    %158 = vmatprep.subr.bf16.mxu0 0
    %159 = vmatpush1.bf16.msra.mxu0 0
    %160 = vmatprep.subr.bf16.mxu0 0
    %161 = vmatpush1.bf16.msra.mxu0 0
    %162 = vmatprep.subr.bf16.mxu0 0
    %163 = vmatpush1.bf16.msra.mxu0 0
    %164 = vmatprep.subr.bf16.mxu0 0
    %165 = vmatpush1.bf16.msra.mxu0 0
    %166 = vmatprep.mubr.bf16.mxu0 0
    %167 = vmatmul.mubr.bf16.gmra.mrb[0].mxu0 %v91
    %v168 = vpop.f32.mrb[0].mxu0
    %v169 = vadd.f32 %v60, %v168
    %v170 = vpop.f32.mrb[0].mxu0
    %v171 = vadd.f32 %v64, %v170
    %v172 = vpop.f32.mrb[0].mxu0
    %v173 = vpop.f32.mrb[0].mxu0
    %174 = vdwg.mxu0
    %v175 = vmax.f32 %v128, 0.0
    %v176 = vmax.f32 %v130, 0.0
    %v177 = vmax.f32 %v169, 0.0
    %v178 = vmax.f32 %v171, 0.0
    %v179 = vpack.c.bf16 %v175, %v175
    %v180 = vpack.c.bf16 %v176, %v176
    %v181 = vpack.c.bf16 %v177, %v177
    %v182 = vpack.c.bf16 %v178, %v178
    %v183 = vld [vmem:[#allocation2] sm:$0xff]
    %v184 = vld [vmem:[#allocation2 + $0x8] sm:$0xff]
    %v185 = vld [vmem:[#allocation2 + $0x10] sm:$0xff]
    %v186 = vld [vmem:[#allocation2 + $0x18] sm:$0xff]
    %v187 = vld [vmem:[#allocation2 + $0x20] sm:$0xff]
    %v188 = vld [vmem:[#allocation2 + $0x28] sm:$0xff]
    %v189 = vld [vmem:[#allocation2 + $0x30] sm:$0xff]
    %v190 = vld [vmem:[#allocation2 + $0x38] sm:$0xff]
    %v191 = vld [vmem:[#allocation2 + $0x40] sm:$0xff]
    %v192 = vld [vmem:[#allocation2 + $0x48] sm:$0xff]
    %v193 = vld [vmem:[#allocation2 + $0x50] sm:$0xff]
    %v194 = vld [vmem:[#allocation2 + $0x58] sm:$0xff]
    %v195 = vld [vmem:[#allocation2 + $0x60] sm:$0xff]
    %v196 = vld [vmem:[#allocation2 + $0x68] sm:$0xff]
    %v197 = vld [vmem:[#allocation2 + $0x70] sm:$0xff]
    %v198 = vld [vmem:[#allocation2 + $0x78] sm:$0xff]
    %v199 = vld [vmem:[#allocation2 + $0x80] sm:$0xff]
    %v200 = vld [vmem:[#allocation2 + $0x88] sm:$0xff]
    %v201 = vld [vmem:[#allocation2 + $0x90] sm:$0xff]
    %v202 = vld [vmem:[#allocation2 + $0x98] sm:$0xff]
    %v203 = vld [vmem:[#allocation2 + $0xa0] sm:$0xff]
    %v204 = vld [vmem:[#allocation2 + $0xa8] sm:$0xff]
    %v205 = vld [vmem:[#allocation2 + $0xb0] sm:$0xff]
    %v206 = vld [vmem:[#allocation2 + $0xb8] sm:$0xff]
    %v207 = vld [vmem:[#allocation2 + $0xc0] sm:$0xff]
    %v208 = vld [vmem:[#allocation2 + $0xc8] sm:$0xff]
    %v209 = vld [vmem:[#allocation2 + $0xd0] sm:$0xff]
    %v210 = vld [vmem:[#allocation2 + $0xd8] sm:$0xff]
    %v211 = vld [vmem:[#allocation2 + $0xe0] sm:$0xff]
    %v212 = vld [vmem:[#allocation2 + $0xe8] sm:$0xff]
    %v213 = vld [vmem:[#allocation2 + $0xf0] sm:$0xff]
    %v214 = vld [vmem:[#allocation2 + $0xf8] sm:$0xff]
    %v215 = vld [vmem:[#allocation2 + $0x100] sm:$0xff]
    %v216 = vld [vmem:[#allocation2 + $0x108] sm:$0xff]
    %v217 = vld [vmem:[#allocation2 + $0x110] sm:$0xff]
    %v218 = vld [vmem:[#allocation2 + $0x118] sm:$0xff]
    %v219 = vld [vmem:[#allocation2 + $0x120] sm:$0xff]
    %v220 = vld [vmem:[#allocation2 + $0x128] sm:$0xff]
    %v221 = vld [vmem:[#allocation2 + $0x130] sm:$0xff]
    %v222 = vld [vmem:[#allocation2 + $0x138] sm:$0xff]
    %v223 = vld [vmem:[#allocation2 + $0x140] sm:$0xff]
    %v224 = vld [vmem:[#allocation2 + $0x148] sm:$0xff]
    %v225 = vld [vmem:[#allocation2 + $0x150] sm:$0xff]
    %v226 = vld [vmem:[#allocation2 + $0x158] sm:$0xff]
    %v227 = vld [vmem:[#allocation2 + $0x160] sm:$0xff]
    %v228 = vld [vmem:[#allocation2 + $0x168] sm:$0xff]
    %v229 = vld [vmem:[#allocation2 + $0x170] sm:$0xff]
    %v230 = vld [vmem:[#allocation2 + $0x178] sm:$0xff]
    %v231 = vld [vmem:[#allocation2 + $0x180] sm:$0xff]
    %v232 = vld [vmem:[#allocation2 + $0x188] sm:$0xff]
    %v233 = vld [vmem:[#allocation2 + $0x190] sm:$0xff]
    %v234 = vld [vmem:[#allocation2 + $0x198] sm:$0xff]
    %v235 = vld [vmem:[#allocation2 + $0x1a0] sm:$0xff]
    %v236 = vld [vmem:[#allocation2 + $0x1a8] sm:$0xff]
    %v237 = vld [vmem:[#allocation2 + $0x1b0] sm:$0xff]
    %v238 = vld [vmem:[#allocation2 + $0x1b8] sm:$0xff]
    %v239 = vld [vmem:[#allocation2 + $0x1c0] sm:$0xff]
    %v240 = vld [vmem:[#allocation2 + $0x1c8] sm:$0xff]
    %v241 = vld [vmem:[#allocation2 + $0x1d0] sm:$0xff]
    %v242 = vld [vmem:[#allocation2 + $0x1d8] sm:$0xff]
    %v243 = vld [vmem:[#allocation2 + $0x1e0] sm:$0xff]
    %v244 = vld [vmem:[#allocation2 + $0x1e8] sm:$0xff]
    %v245 = vld [vmem:[#allocation2 + $0x1f0] sm:$0xff]
    %v246 = vld [vmem:[#allocation2 + $0x1f8] sm:$0xff]
    %v247 = vld [vmem:[%s4] sm:$0x3]
    %v249 = vlaneseq
    %v250 = vshrl.u32 %v249, 7
    %v251 = vsub.s32 0, %v250
    %v252 = vrot.slane %v247, %v251
    %v253 = vlaneseq
    %v254 = vshrl.u32 %v253, 7
    %v255 = vsub.s32 1, %v254
    %v256 = vrot.slane %v247, %v255
    %v323 = vunpack.c.l.b16 %v183
    %v324 = vunpack.c.h.b16 %v183
    %v325 = vunpack.c.l.b16 %v184
    %v326 = vunpack.c.h.b16 %v184
    %v327 = vunpack.c.l.b16 %v185
    %v328 = vunpack.c.h.b16 %v185
    %v329 = vunpack.c.l.b16 %v186
    %v330 = vunpack.c.h.b16 %v186
    %v331 = vunpack.c.l.b16 %v187
    %v332 = vunpack.c.h.b16 %v187
    %v333 = vunpack.c.l.b16 %v188
    %v334 = vunpack.c.h.b16 %v188
    %v335 = vunpack.c.l.b16 %v189
    %v336 = vunpack.c.h.b16 %v189
    %v337 = vunpack.c.l.b16 %v190
    %v338 = vunpack.c.h.b16 %v190
    %v339 = vunpack.c.l.b16 %v191
    %v340 = vunpack.c.h.b16 %v191
    %v341 = vunpack.c.l.b16 %v192
    %v342 = vunpack.c.h.b16 %v192
    %v343 = vunpack.c.l.b16 %v193
    %v344 = vunpack.c.h.b16 %v193
    %v345 = vunpack.c.l.b16 %v194
    %v346 = vunpack.c.h.b16 %v194
    %v347 = vunpack.c.l.b16 %v195
    %v348 = vunpack.c.h.b16 %v195
    %v349 = vunpack.c.l.b16 %v196
    %v350 = vunpack.c.h.b16 %v196
    %v351 = vunpack.c.l.b16 %v197
    %v352 = vunpack.c.h.b16 %v197
    %v353 = vunpack.c.l.b16 %v198
    %v354 = vunpack.c.h.b16 %v198
    %v355 = vunpack.c.l.b16 %v199
    %v356 = vunpack.c.h.b16 %v199
    %v357 = vunpack.c.l.b16 %v200
    %v358 = vunpack.c.h.b16 %v200
    %v359 = vunpack.c.l.b16 %v201
    %v360 = vunpack.c.h.b16 %v201
    %v361 = vunpack.c.l.b16 %v202
    %v362 = vunpack.c.h.b16 %v202
    %v363 = vunpack.c.l.b16 %v203
    %v364 = vunpack.c.h.b16 %v203
    %v365 = vunpack.c.l.b16 %v204
    %v366 = vunpack.c.h.b16 %v204
    %v367 = vunpack.c.l.b16 %v205
    %v368 = vunpack.c.h.b16 %v205
    %v369 = vunpack.c.l.b16 %v206
    %v370 = vunpack.c.h.b16 %v206
    %v371 = vunpack.c.l.b16 %v207
    %v372 = vunpack.c.h.b16 %v207
    %v373 = vunpack.c.l.b16 %v208
    %v374 = vunpack.c.h.b16 %v208
    %v375 = vunpack.c.l.b16 %v209
    %v376 = vunpack.c.h.b16 %v209
    %v377 = vunpack.c.l.b16 %v210
    %v378 = vunpack.c.h.b16 %v210
    %v379 = vunpack.c.l.b16 %v211
    %v380 = vunpack.c.h.b16 %v211
    %v381 = vunpack.c.l.b16 %v212
    %v382 = vunpack.c.h.b16 %v212
    %v383 = vunpack.c.l.b16 %v213
    %v384 = vunpack.c.h.b16 %v213
    %v385 = vunpack.c.l.b16 %v214
    %v386 = vunpack.c.h.b16 %v214
    %v387 = vunpack.c.l.b16 %v215
    %v388 = vunpack.c.h.b16 %v215
    %v389 = vunpack.c.l.b16 %v216
    %v390 = vunpack.c.h.b16 %v216
    %v391 = vunpack.c.l.b16 %v217
    %v392 = vunpack.c.h.b16 %v217
    %v393 = vunpack.c.l.b16 %v218
    %v394 = vunpack.c.h.b16 %v218
    %v395 = vunpack.c.l.b16 %v219
    %v396 = vunpack.c.h.b16 %v219
    %v397 = vunpack.c.l.b16 %v220
    %v398 = vunpack.c.h.b16 %v220
    %v399 = vunpack.c.l.b16 %v221
    %v400 = vunpack.c.h.b16 %v221
    %v401 = vunpack.c.l.b16 %v222
    %v402 = vunpack.c.h.b16 %v222
    %v403 = vunpack.c.l.b16 %v223
    %v404 = vunpack.c.h.b16 %v223
    %v405 = vunpack.c.l.b16 %v224
    %v406 = vunpack.c.h.b16 %v224
    %v407 = vunpack.c.l.b16 %v225
    %v408 = vunpack.c.h.b16 %v225
    %v409 = vunpack.c.l.b16 %v226
    %v410 = vunpack.c.h.b16 %v226
    %v411 = vunpack.c.l.b16 %v227
    %v412 = vunpack.c.h.b16 %v227
    %v413 = vunpack.c.l.b16 %v228
    %v414 = vunpack.c.h.b16 %v228
    %v415 = vunpack.c.l.b16 %v229
    %v416 = vunpack.c.h.b16 %v229
    %v417 = vunpack.c.l.b16 %v230
    %v418 = vunpack.c.h.b16 %v230
    %v419 = vunpack.c.l.b16 %v231
    %v420 = vunpack.c.h.b16 %v231
    %v421 = vunpack.c.l.b16 %v232
    %v422 = vunpack.c.h.b16 %v232
    %v423 = vunpack.c.l.b16 %v233
    %v424 = vunpack.c.h.b16 %v233
    %v425 = vunpack.c.l.b16 %v234
    %v426 = vunpack.c.h.b16 %v234
    %v427 = vunpack.c.l.b16 %v235
    %v428 = vunpack.c.h.b16 %v235
    %v429 = vunpack.c.l.b16 %v236
    %v430 = vunpack.c.h.b16 %v236
    %v431 = vunpack.c.l.b16 %v237
    %v432 = vunpack.c.h.b16 %v237
    %v433 = vunpack.c.l.b16 %v238
    %v434 = vunpack.c.h.b16 %v238
    %v435 = vunpack.c.l.b16 %v239
    %v436 = vunpack.c.h.b16 %v239
    %v437 = vunpack.c.l.b16 %v240
    %v438 = vunpack.c.h.b16 %v240
    %v439 = vunpack.c.l.b16 %v241
    %v440 = vunpack.c.h.b16 %v241
    %v441 = vunpack.c.l.b16 %v242
    %v442 = vunpack.c.h.b16 %v242
    %v443 = vunpack.c.l.b16 %v243
    %v444 = vunpack.c.h.b16 %v243
    %v445 = vunpack.c.l.b16 %v244
    %v446 = vunpack.c.h.b16 %v244
    %v447 = vunpack.c.l.b16 %v245
    %v448 = vunpack.c.h.b16 %v245
    %v449 = vunpack.c.l.b16 %v246
    %v450 = vunpack.c.h.b16 %v246
    %v451 = vpack.c.b16 %v325, %v323
    %v452 = vpack.c.b16 %v326, %v324
    %v453 = vpack.c.b16 %v329, %v327
    %v454 = vpack.c.b16 %v330, %v328
    %v455 = vpack.c.b16 %v333, %v331
    %v456 = vpack.c.b16 %v334, %v332
    %v457 = vpack.c.b16 %v337, %v335
    %v458 = vpack.c.b16 %v338, %v336
    %v459 = vpack.c.b16 %v341, %v339
    %v460 = vpack.c.b16 %v342, %v340
    %v461 = vpack.c.b16 %v345, %v343
    %v462 = vpack.c.b16 %v346, %v344
    %v463 = vpack.c.b16 %v349, %v347
    %v464 = vpack.c.b16 %v350, %v348
    %v465 = vpack.c.b16 %v353, %v351
    %v466 = vpack.c.b16 %v354, %v352
    %v467 = vpack.c.b16 %v357, %v355
    %v468 = vpack.c.b16 %v358, %v356
    %v469 = vpack.c.b16 %v361, %v359
    %v470 = vpack.c.b16 %v362, %v360
    %v471 = vpack.c.b16 %v365, %v363
    %v472 = vpack.c.b16 %v366, %v364
    %v473 = vpack.c.b16 %v369, %v367
    %v474 = vpack.c.b16 %v370, %v368
    %v475 = vpack.c.b16 %v373, %v371
    %v476 = vpack.c.b16 %v374, %v372
    %v477 = vpack.c.b16 %v377, %v375
    %v478 = vpack.c.b16 %v378, %v376
    %v479 = vpack.c.b16 %v381, %v379
    %v480 = vpack.c.b16 %v382, %v380
    %v481 = vpack.c.b16 %v385, %v383
    %v482 = vpack.c.b16 %v386, %v384
    %v483 = vpack.c.b16 %v389, %v387
    %v484 = vpack.c.b16 %v390, %v388
    %v485 = vpack.c.b16 %v393, %v391
    %v486 = vpack.c.b16 %v394, %v392
    %v487 = vpack.c.b16 %v397, %v395
    %v488 = vpack.c.b16 %v398, %v396
    %v489 = vpack.c.b16 %v401, %v399
    %v490 = vpack.c.b16 %v402, %v400
    %v491 = vpack.c.b16 %v405, %v403
    %v492 = vpack.c.b16 %v406, %v404
    %v493 = vpack.c.b16 %v409, %v407
    %v494 = vpack.c.b16 %v410, %v408
    %v495 = vpack.c.b16 %v413, %v411
    %v496 = vpack.c.b16 %v414, %v412
    %v497 = vpack.c.b16 %v417, %v415
    %v498 = vpack.c.b16 %v418, %v416
    %v499 = vpack.c.b16 %v421, %v419
    %v500 = vpack.c.b16 %v422, %v420
    %v501 = vpack.c.b16 %v425, %v423
    %v502 = vpack.c.b16 %v426, %v424
    %v503 = vpack.c.b16 %v429, %v427
    %v504 = vpack.c.b16 %v430, %v428
    %v505 = vpack.c.b16 %v433, %v431
    %v506 = vpack.c.b16 %v434, %v432
    %v507 = vpack.c.b16 %v437, %v435
    %v508 = vpack.c.b16 %v438, %v436
    %v509 = vpack.c.b16 %v441, %v439
    %v510 = vpack.c.b16 %v442, %v440
    %v511 = vpack.c.b16 %v445, %v443
    %v512 = vpack.c.b16 %v446, %v444
    %v513 = vpack.c.b16 %v449, %v447
    %v514 = vpack.c.b16 %v450, %v448
    %579 = vmatprep.subr.bf16.mxu0 %v452
    %580 = vmatpush1.bf16.msra.mxu0 %v451
    %581 = vmatprep.subr.bf16.mxu0 %v454
    %582 = vmatpush1.bf16.msra.mxu0 %v453
    %583 = vmatprep.subr.bf16.mxu0 %v456
    %584 = vmatpush1.bf16.msra.mxu0 %v455
    %585 = vmatprep.subr.bf16.mxu0 %v458
    %586 = vmatpush1.bf16.msra.mxu0 %v457
    %587 = vmatprep.subr.bf16.mxu0 %v460
    %588 = vmatpush1.bf16.msra.mxu0 %v459
    %589 = vmatprep.subr.bf16.mxu0 %v462
    %590 = vmatpush1.bf16.msra.mxu0 %v461
    %591 = vmatprep.subr.bf16.mxu0 %v464
    %592 = vmatpush1.bf16.msra.mxu0 %v463
    %593 = vmatprep.subr.bf16.mxu0 %v466
    %594 = vmatpush1.bf16.msra.mxu0 %v465
    %595 = vmatprep.subr.bf16.mxu0 %v468
    %596 = vmatpush1.bf16.msra.mxu0 %v467
    %597 = vmatprep.subr.bf16.mxu0 %v470
    %598 = vmatpush1.bf16.msra.mxu0 %v469
    %599 = vmatprep.subr.bf16.mxu0 %v472
    %600 = vmatpush1.bf16.msra.mxu0 %v471
    %601 = vmatprep.subr.bf16.mxu0 %v474
    %602 = vmatpush1.bf16.msra.mxu0 %v473
    %603 = vmatprep.subr.bf16.mxu0 %v476
    %604 = vmatpush1.bf16.msra.mxu0 %v475
    %605 = vmatprep.subr.bf16.mxu0 %v478
    %606 = vmatpush1.bf16.msra.mxu0 %v477
    %607 = vmatprep.subr.bf16.mxu0 %v480
    %608 = vmatpush1.bf16.msra.mxu0 %v479
    %609 = vmatprep.subr.bf16.mxu0 %v482
    %610 = vmatpush1.bf16.msra.mxu0 %v481
    %611 = vmatprep.mubr.bf16.mxu0 %v180
    %612 = vmatmul.mubr.bf16.gmra.mrb[0].mxu0 %v179
    %v613 = vpop.f32.mrb[0].mxu0
    %v614 = vadd.f32 %v252, %v613
    %v615 = vpop.f32.mrb[0].mxu0
    %v616 = vadd.f32 %v256, %v615
    %v617 = vpop.f32.mrb[0].mxu0
    %v618 = vpop.f32.mrb[0].mxu0
    %619 = vdwg.mxu0
    %620 = vmatprep.subr.bf16.mxu0 %v484
    %621 = vmatpush1.bf16.msra.mxu0 %v483
    %622 = vmatprep.subr.bf16.mxu0 %v486
    %623 = vmatpush1.bf16.msra.mxu0 %v485
    %624 = vmatprep.subr.bf16.mxu0 %v488
    %625 = vmatpush1.bf16.msra.mxu0 %v487
    %626 = vmatprep.subr.bf16.mxu0 %v490
    %627 = vmatpush1.bf16.msra.mxu0 %v489
    %628 = vmatprep.subr.bf16.mxu0 %v492
    %629 = vmatpush1.bf16.msra.mxu0 %v491
    %630 = vmatprep.subr.bf16.mxu0 %v494
    %631 = vmatpush1.bf16.msra.mxu0 %v493
    %632 = vmatprep.subr.bf16.mxu0 %v496
    %633 = vmatpush1.bf16.msra.mxu0 %v495
    %634 = vmatprep.subr.bf16.mxu0 %v498
    %635 = vmatpush1.bf16.msra.mxu0 %v497
    %636 = vmatprep.subr.bf16.mxu0 %v500
    %637 = vmatpush1.bf16.msra.mxu0 %v499
    %638 = vmatprep.subr.bf16.mxu0 %v502
    %639 = vmatpush1.bf16.msra.mxu0 %v501
    %640 = vmatprep.subr.bf16.mxu0 %v504
    %641 = vmatpush1.bf16.msra.mxu0 %v503
    %642 = vmatprep.subr.bf16.mxu0 %v506
    %643 = vmatpush1.bf16.msra.mxu0 %v505
    %644 = vmatprep.subr.bf16.mxu0 %v508
    %645 = vmatpush1.bf16.msra.mxu0 %v507
    %646 = vmatprep.subr.bf16.mxu0 %v510
    %647 = vmatpush1.bf16.msra.mxu0 %v509
    %648 = vmatprep.subr.bf16.mxu0 %v512
    %649 = vmatpush1.bf16.msra.mxu0 %v511
    %650 = vmatprep.subr.bf16.mxu0 %v514
    %651 = vmatpush1.bf16.msra.mxu0 %v513
    %652 = vmatprep.mubr.bf16.mxu0 %v182
    %653 = vmatmul.mubr.bf16.gmra.mrb[0].mxu0 %v181
    %v654 = vpop.f32.mrb[0].mxu0
    %v655 = vadd.f32 %v614, %v654
    %v656 = vpop.f32.mrb[0].mxu0
    %v657 = vadd.f32 %v616, %v656
    %v658 = vpop.f32.mrb[0].mxu0
    %v659 = vpop.f32.mrb[0].mxu0
    %660 = vdwg.mxu0
    %v661 = vmax.f32 %v655, 0.0
    %v662 = vmax.f32 %v657, 0.0
    %v663 = vpack.c.bf16 %v661, %v661
    %v664 = vpack.c.bf16 %v662, %v662
    %v665 = vld [vmem:[%s5] sm:$0xf]
    %v666 = vld [vmem:[%s5 + $0x4] sm:$0xf]
    %v667 = vld [vmem:[%s5 + $0x8] sm:$0xf]
    %v668 = vld [vmem:[%s5 + $0xc] sm:$0xf]
    %v669 = vld [vmem:[%s5 + $0x10] sm:$0xf]
    %v670 = vld [vmem:[%s5 + $0x14] sm:$0xf]
    %v671 = vld [vmem:[%s5 + $0x18] sm:$0xf]
    %v672 = vld [vmem:[%s5 + $0x1c] sm:$0xf]
    %v673 = vld [vmem:[%s5 + $0x20] sm:$0xf]
    %v674 = vld [vmem:[%s5 + $0x24] sm:$0xf]
    %v675 = vld [vmem:[%s5 + $0x28] sm:$0xf]
    %v676 = vld [vmem:[%s5 + $0x2c] sm:$0xf]
    %v677 = vld [vmem:[%s5 + $0x30] sm:$0xf]
    %v678 = vld [vmem:[%s5 + $0x34] sm:$0xf]
    %v679 = vld [vmem:[%s5 + $0x38] sm:$0xf]
    %v680 = vld [vmem:[%s5 + $0x3c] sm:$0xf]
    %v681 = vld [vmem:[%s5 + $0x40] sm:$0xf]
    %v682 = vld [vmem:[%s5 + $0x44] sm:$0xf]
    %v683 = vld [vmem:[%s5 + $0x48] sm:$0xf]
    %v684 = vld [vmem:[%s5 + $0x4c] sm:$0xf]
    %v685 = vld [vmem:[%s5 + $0x50] sm:$0xf]
    %v686 = vld [vmem:[%s5 + $0x54] sm:$0xf]
    %v687 = vld [vmem:[%s5 + $0x58] sm:$0xf]
    %v688 = vld [vmem:[%s5 + $0x5c] sm:$0xf]
    %v689 = vld [vmem:[%s5 + $0x60] sm:$0xf]
    %v690 = vld [vmem:[%s5 + $0x64] sm:$0xf]
    %v691 = vld [vmem:[%s5 + $0x68] sm:$0xf]
    %v692 = vld [vmem:[%s5 + $0x6c] sm:$0xf]
    %v693 = vld [vmem:[%s5 + $0x70] sm:$0xf]
    %v694 = vld [vmem:[%s5 + $0x74] sm:$0xf]
    %v695 = vld [vmem:[%s5 + $0x78] sm:$0xf]
    %v696 = vld [vmem:[%s5 + $0x7c] sm:$0xf]
    %v697 = vld [vmem:[%s6] sm:$0x1]
    %v699 = vlaneseq
    %v700 = vshrl.u32 %v699, 7
    %v701 = vsub.s32 0, %v700
    %v702 = vrot.slane %v697, %v701
    %v736 = vunpack.c.l.b16 %v665
    %v737 = vunpack.c.l.b16 %v666
    %v738 = vunpack.c.l.b16 %v667
    %v739 = vunpack.c.l.b16 %v668
    %v740 = vunpack.c.l.b16 %v669
    %v741 = vunpack.c.l.b16 %v670
    %v742 = vunpack.c.l.b16 %v671
    %v743 = vunpack.c.l.b16 %v672
    %v744 = vunpack.c.l.b16 %v673
    %v745 = vunpack.c.l.b16 %v674
    %v746 = vunpack.c.l.b16 %v675
    %v747 = vunpack.c.l.b16 %v676
    %v748 = vunpack.c.l.b16 %v677
    %v749 = vunpack.c.l.b16 %v678
    %v750 = vunpack.c.l.b16 %v679
    %v751 = vunpack.c.l.b16 %v680
    %v752 = vunpack.c.l.b16 %v681
    %v753 = vunpack.c.l.b16 %v682
    %v754 = vunpack.c.l.b16 %v683
    %v755 = vunpack.c.l.b16 %v684
    %v756 = vunpack.c.l.b16 %v685
    %v757 = vunpack.c.l.b16 %v686
    %v758 = vunpack.c.l.b16 %v687
    %v759 = vunpack.c.l.b16 %v688
    %v760 = vunpack.c.l.b16 %v689
    %v761 = vunpack.c.l.b16 %v690
    %v762 = vunpack.c.l.b16 %v691
    %v763 = vunpack.c.l.b16 %v692
    %v764 = vunpack.c.l.b16 %v693
    %v765 = vunpack.c.l.b16 %v694
    %v766 = vunpack.c.l.b16 %v695
    %v767 = vunpack.c.l.b16 %v696
    %v768 = vpack.c.b16 %v737, %v736
    %v769 = vpack.c.b16 %v739, %v738
    %v770 = vpack.c.b16 %v741, %v740
    %v771 = vpack.c.b16 %v743, %v742
    %v772 = vpack.c.b16 %v745, %v744
    %v773 = vpack.c.b16 %v747, %v746
    %v774 = vpack.c.b16 %v749, %v748
    %v775 = vpack.c.b16 %v751, %v750
    %v776 = vpack.c.b16 %v753, %v752
    %v777 = vpack.c.b16 %v755, %v754
    %v778 = vpack.c.b16 %v757, %v756
    %v779 = vpack.c.b16 %v759, %v758
    %v780 = vpack.c.b16 %v761, %v760
    %v781 = vpack.c.b16 %v763, %v762
    %v782 = vpack.c.b16 %v765, %v764
    %v783 = vpack.c.b16 %v767, %v766
    %800 = vmatprep.subr.bf16.mxu0 0
    %801 = vmatpush1.bf16.msra.mxu0 %v768
    %802 = vmatprep.subr.bf16.mxu0 0
    %803 = vmatpush1.bf16.msra.mxu0 %v769
    %804 = vmatprep.subr.bf16.mxu0 0
    %805 = vmatpush1.bf16.msra.mxu0 %v770
    %806 = vmatprep.subr.bf16.mxu0 0
    %807 = vmatpush1.bf16.msra.mxu0 %v771
    %808 = vmatprep.subr.bf16.mxu0 0
    %809 = vmatpush1.bf16.msra.mxu0 %v772
    %810 = vmatprep.subr.bf16.mxu0 0
    %811 = vmatpush1.bf16.msra.mxu0 %v773
    %812 = vmatprep.subr.bf16.mxu0 0
    %813 = vmatpush1.bf16.msra.mxu0 %v774
    %814 = vmatprep.subr.bf16.mxu0 0
    %815 = vmatpush1.bf16.msra.mxu0 %v775
    %816 = vmatprep.subr.bf16.mxu0 0
    %817 = vmatpush1.bf16.msra.mxu0 %v776
    %818 = vmatprep.subr.bf16.mxu0 0
    %819 = vmatpush1.bf16.msra.mxu0 %v777
    %820 = vmatprep.subr.bf16.mxu0 0
    %821 = vmatpush1.bf16.msra.mxu0 %v778
    %822 = vmatprep.subr.bf16.mxu0 0
    %823 = vmatpush1.bf16.msra.mxu0 %v779
    %824 = vmatprep.subr.bf16.mxu0 0
    %825 = vmatpush1.bf16.msra.mxu0 %v780
    %826 = vmatprep.subr.bf16.mxu0 0
    %827 = vmatpush1.bf16.msra.mxu0 %v781
    %828 = vmatprep.subr.bf16.mxu0 0
    %829 = vmatpush1.bf16.msra.mxu0 %v782
    %830 = vmatprep.subr.bf16.mxu0 0
    %831 = vmatpush1.bf16.msra.mxu0 %v783
    %832 = vmatprep.mubr.bf16.mxu0 %v664
    %833 = vmatmul.mubr.bf16.gmra.mrb[0].mxu0 %v663
    %v834 = vpop.f32.mrb[0].mxu0
    %v835 = vadd.f32 %v702, %v834
    %v836 = vpop.f32.mrb[0].mxu0
    %v837 = vpop.f32.mrb[0].mxu0
    %v838 = vpop.f32.mrb[0].mxu0
    %839 = vdwg.mxu0
    %vm840 = vcmask 31744
    %841 = vst.msk [vmem:[%s7] sm:$0xff] %vm840, %v835
    // Predicated region
    $region34: #{tpu_custom_call.1} parent=1 // pred_check
      _
    $region35: #{tpu_custom_call.1} parent=1 // pred_check_branch
      %843 = sbr.rel (0) target = $region37
    $region36: #{tpu_custom_call.1} parent=1 // pred_region
      _
    $region37: #{tpu_custom_call.1} parent=1 // pred_fallthru
      _
    // Predicated region
    $region38: #{tpu_custom_call.1} parent=1 // pred_check
      _
    $region39: #{tpu_custom_call.1} parent=1 // pred_check_branch
      %845 = sbr.rel (0) target = $region41
    $region40: #{tpu_custom_call.1} parent=1 // pred_region
      _
    $region41: #{tpu_custom_call.1} parent=1 // pred_fallthru
      _
    %846 = vsyncpa [#allocation3], 1

</llo_original>
